<compile_context>
chip_gen: v5e
topology: v5e:2x2
jax: 0.10.0
libtpu: 0.0.40
codegen_flags: <defaults>
</compile_context>

<pallas_src>
import functools
import math

import jax
import jax.numpy as jnp
from jax.experimental import pallas as pl
from jax.experimental.pallas import tpu as pltpu


# ------------------------------------------------------------------ helpers ---

def _pick_tile(dim, target, align):
    """Largest tile <= target that is `align`-aligned and divides `dim` exactly
    (falls back to the full dim, which always satisfies the (8,128) rule)."""
    if dim <= target:
        return dim
    t = (min(target, dim) // align) * align
    while t >= align:
        if dim % t == 0:
            return t
        t -= align
    return dim


def _q_tile_target():
    """Per-generation q-tile target: smaller tiles on 64 MiB-VMEM parts (v7x)."""
    try:
        vmem = getattr(pltpu.get_tpu_info(), "vmem_capacity_bytes", 0) or 0
    except Exception:
        vmem = 0
    return 128 if (vmem and vmem <= (64 << 20)) else 256


def _vmem_limit(per_step_bytes, scratch_bytes=0):
    """Double-buffered operand blocks + scratch with headroom, clamped to a sane range."""
    need = 2 * per_step_bytes + scratch_bytes
    return int(min(max(2 * need + (4 << 20), 32 << 20), 96 << 20))


def _row_map(qt, col):
    return lambda b, i: (b * qt + i, col)


def _batch_map(col):
    return lambda b, i: (b, col)


def _mask_map(full_q):
    if full_q:
        return lambda b, i: (b, i, 0)
    return lambda b, i: (b, 0, 0)


# ------------------------------------------------------------ linear kernel ---

def _linear_kernel(x_ref, w_ref, b_ref, o_ref, acc_ref):
    """Tiled y = x @ W_t + b. bf16 MXU inputs, f32 VMEM accumulator, bias in finalize."""
    @pl.when(pl.program_id(2) == 0)
    def _():
        acc_ref[...] = jnp.zeros_like(acc_ref)

    acc_ref[...] += jnp.dot(x_ref[...], w_ref[...],
                            preferred_element_type=jnp.float32)

    @pl.when(pl.program_id(2) == pl.num_programs(2) - 1)
    def _():
        o_ref[...] = (acc_ref[...] + b_ref[...]).astype(o_ref.dtype)


def linear(x2d, w_t, b, *, tm=256, tn=512, tk=512):
    """y = x @ w_t + b; x2d/w_t bf16, bias f32, output bf16 (an attention intermediate)."""
    M, K = x2d.shape
    N = w_t.shape[1]
    TM = _pick_tile(M, tm, 8)
    TN = _pick_tile(N, tn, 128)
    TK = _pick_tile(K, tk, 128)
    return pl.pallas_call(
        _linear_kernel,
        out_shape=jax.ShapeDtypeStruct((M, N), jnp.bfloat16),
        grid=(M // TM, N // TN, K // TK),
        in_specs=[pl.BlockSpec((TM, TK), lambda i, j, k: (i, k)),
                  pl.BlockSpec((TK, TN), lambda i, j, k: (k, j)),
                  pl.BlockSpec((1, TN), lambda i, j, k: (0, j))],
        out_specs=pl.BlockSpec((TM, TN), lambda i, j, k: (i, j)),
        scratch_shapes=[pltpu.VMEM((TM, TN), jnp.float32)],
        compiler_params=pltpu.CompilerParams(
            dimension_semantics=("parallel", "parallel", "arbitrary")),
    )(x2d, w_t, b.reshape(1, N))


# -------------------------------------------- fused attention + out-proj ------

def _mha_attention_kernel(q_ref, k_ref, v_ref, m_ref, keep_ref, wo_ref, bo_ref,
                          o_ref, attn_ref, ctx_ref, *, num_heads):
    """All heads of one (batch, q-tile): softmax(q k^T) v per head into a (TQ, D) VMEM
    context buffer, then ONE full-depth W_o matmul. Output block is lane-dense [TQ, D]."""
    TQ, D = q_ref.shape
    Sk = k_ref.shape[0]
    dk = D // num_heads

    # Mask bias hoisted out of the head loop; the is_src column-keep mask is combined
    # in-kernel (no rebuilt mask slab in HBM).  0 => masked.
    gate = m_ref[0] * keep_ref[0]                      # (mq, Sk) * (1, Sk)
    bias = jnp.where(gate == 0.0, -1e9, 0.0)

    for head in range(num_heads):                      # static unroll; per-head results are
        lo = head * dk                                 # committed to VMEM refs immediately.
        # q @ k^T without materializing a transpose (contract last axes, bf16 MXU path).
        s = jax.lax.dot_general(q_ref[:, lo:lo + dk], k_ref[:, lo:lo + dk],
                                (((1,), (1,)), ((), ())),
                                preferred_element_type=jnp.float32)
        s = s + bias                                   # scale already folded into W_q
        s = s - jnp.max(s, axis=-1, keepdims=True)
        p = jnp.exp(s)
        p = p * pl.reciprocal(jnp.sum(p, axis=-1, keepdims=True), approx=False)
        if head == 0:
            attn_ref[0] = p                            # attention summed over heads (f32)
        else:
            attn_ref[0] = attn_ref[0] + p
        ctx_ref[:, lo:lo + dk] = jnp.dot(
            p.astype(v_ref.dtype), v_ref[:, lo:lo + dk],
            preferred_element_type=jnp.float32).astype(ctx_ref.dtype)

    # Single full-D-contraction output projection on the MXU (+ bias).
    o_ref[...] = (jnp.dot(ctx_ref[...], wo_ref[...],
                          preferred_element_type=jnp.float32)
                  + bo_ref[...]).astype(o_ref.dtype)


def _attention_call(q_arr, q_col, k_arr, k_col, v_arr, v_col, mask, keep,
                    wo_t, bo, *, num_heads, B, Sq, Sk, D):
    """q rows: [B*Sq, *]; k/v rows: [B*Sk, *]; mask: [B, 1|Sq, Sk]; keep: [B, 1, Sk].
    Returns (projected output [B*Sq, D] f32, attention summed over heads [B, Sq, Sk])."""
    mq = mask.shape[1]
    TQ = _pick_tile(Sq, _q_tile_target(), 8)
    qt = Sq // TQ
    mqb = TQ if mq == Sq else 1

    per_step = (TQ * D * 2 + 2 * Sk * D * 2 + mqb * Sk * 4 + Sk * 4
                + D * D * 2 + D * 4 + TQ * D * 4 + TQ * Sk * 4)
    scratch = TQ * D * 2 + 2 * TQ * Sk * 4
    cost = pl.CostEstimate(
        flops=int(4 * B * Sq * Sk * D + 2 * B * Sq * D * D),
        transcendentals=int(B * num_heads * Sq * Sk),
        bytes_accessed=int(B * Sq * D * 2 + 2 * B * Sk * D * 2 + B * mq * Sk * 4
                           + B * Sk * 4 + D * D * 2 + D * 4
                           + B * Sq * D * 4 + B * Sq * Sk * 4))

    kern = functools.partial(_mha_attention_kernel, num_heads=num_heads)
    out, attn = pl.pallas_call(
        kern,
        out_shape=(jax.ShapeDtypeStruct((B * Sq, D), jnp.float32),
                   jax.ShapeDtypeStruct((B, Sq, Sk), jnp.float32)),
        grid=(B, qt),
        in_specs=[
            pl.BlockSpec((TQ, D), _row_map(qt, q_col)),        # q rows (bf16)
            pl.BlockSpec((Sk, D), _batch_map(k_col)),          # all keys of batch b
            pl.BlockSpec((Sk, D), _batch_map(v_col)),          # all values of batch b
            pl.BlockSpec((1, mqb, Sk), _mask_map(mq == Sq)),   # mask (never h/q-broadcast)
            pl.BlockSpec((1, 1, Sk), lambda b, i: (b, 0, 0)),  # is_src column-keep
            pl.BlockSpec((D, D), lambda b, i: (0, 0)),         # W_o (bf16)
            pl.BlockSpec((1, D), lambda b, i: (0, 0)),         # b_o (f32)
        ],
        out_specs=(
            pl.BlockSpec((TQ, D), _row_map(qt, 0)),
            pl.BlockSpec((1, TQ, Sk), lambda b, i: (b, i, 0)),
        ),
        scratch_shapes=[pltpu.VMEM((TQ, D), jnp.bfloat16)],    # per-step context buffer
        compiler_params=pltpu.CompilerParams(
            dimension_semantics=("parallel", "parallel"),
            vmem_limit_bytes=_vmem_limit(per_step, scratch)),
        cost_estimate=cost,
    )(q_arr, k_arr, v_arr, mask, keep, wo_t, bo.reshape(1, D))
    return out, attn


# ---------------------------------- is_src pass 1: attention column sums only --

def _mha_colsum_kernel(q_ref, k_ref, m_ref, cs_ref, *, num_heads):
    """Sum of softmax(q k^T) over heads and query rows; no V / W_o work, no attn slab."""
    TQ, D = q_ref.shape
    Sk = k_ref.shape[0]
    dk = D // num_heads

    @pl.when(pl.program_id(1) == 0)
    def _():
        cs_ref[...] = jnp.zeros_like(cs_ref)

    bias = jnp.where(m_ref[0] == 0.0, -1e9, 0.0)
    acc = jnp.zeros((1, Sk), jnp.float32)
    for head in range(num_heads):
        lo = head * dk
        s = jax.lax.dot_general(q_ref[:, lo:lo + dk], k_ref[:, lo:lo + dk],
                                (((1,), (1,)), ((), ())),
                                preferred_element_type=jnp.float32)
        s = s + bias
        s = s - jnp.max(s, axis=-1, keepdims=True)
        p = jnp.exp(s)
        p = p * pl.reciprocal(jnp.sum(p, axis=-1, keepdims=True), approx=False)
        acc = acc + jnp.sum(p, axis=0, keepdims=True)
    cs_ref[0] = cs_ref[0] + acc


def _colsum_call(q_arr, q_col, k_arr, k_col, mask, *, num_heads, B, Sq, Sk, D):
    mq = mask.shape[1]
    TQ = _pick_tile(Sq, _q_tile_target(), 8)
    qt = Sq // TQ
    mqb = TQ if mq == Sq else 1
    per_step = TQ * D * 2 + Sk * D * 2 + mqb * Sk * 4 + Sk * 4
    kern = functools.partial(_mha_colsum_kernel, num_heads=num_heads)
    cs = pl.pallas_call(
        kern,
        out_shape=jax.ShapeDtypeStruct((B, 1, Sk), jnp.float32),
        grid=(B, qt),
        in_specs=[
            pl.BlockSpec((TQ, D), _row_map(qt, q_col)),
            pl.BlockSpec((Sk, D), _batch_map(k_col)),
            pl.BlockSpec((1, mqb, Sk), _mask_map(mq == Sq)),
        ],
        out_specs=pl.BlockSpec((1, 1, Sk), lambda b, i: (b, 0, 0)),
        compiler_params=pltpu.CompilerParams(
            dimension_semantics=("parallel", "arbitrary"),
            vmem_limit_bytes=_vmem_limit(per_step, 2 * TQ * Sk * 4)),
    )(q_arr, k_arr, mask)
    return cs[:, 0, :]                                  # [B, Sk]


# --------------------------------------------------------- module forward -----

def _split_cols(arr, n, D):
    """Consume a fused [rows, n*D] projection result directly via column-offset BlockSpecs
    when D is 128-aligned; otherwise fall back to explicit (small) slices."""
    if D % 128 == 0:
        return [(arr, j) for j in range(n)]
    return [(arr[:, j * D:(j + 1) * D], 0) for j in range(n)]


def multi_headed_attention_forward(params, query, key, value, mask=None, *,
                                   num_heads, is_src=False, overlap2=0.75):
    """Matches MultiHeadedAttention.forward; returns (output [B,Sq,D],
    attn summed over heads [B,Sq,Sk]) — the latter mirrors `self.attn`."""
    B, Sq, D = query.shape
    Sk = key.shape[1]
    assert D % num_heads == 0
    bf = jnp.bfloat16

    if mask is None:
        mask3 = jnp.ones((B, 1, Sk), jnp.float32)
    else:
        mask3 = mask.astype(jnp.float32)
        if mask3.ndim == 2:
            mask3 = mask3[:, None, :]                   # [B, Sk] -> [B, 1, Sk]

    # Projections (fused when inputs alias — the common self / memory-attention cases).
    if (query is key) and (key is value):
        qkv = linear(query.reshape(B * Sq, D).astype(bf), params["wqkv_t"], params["bqkv"])
        (q_arr, q_col), (k_arr, k_col), (v_arr, v_col) = _split_cols(qkv, 3, D)
    elif key is value:
        q_arr, q_col = linear(query.reshape(B * Sq, D).astype(bf),
                              params["wq_t"], params["bq"]), 0
        kv = linear(key.reshape(B * Sk, D).astype(bf), params["wkv_t"], params["bkv"])
        (k_arr, k_col), (v_arr, v_col) = _split_cols(kv, 2, D)
    else:
        q_arr, q_col = linear(query.reshape(B * Sq, D).astype(bf),
                              params["wq_t"], params["bq"]), 0
        k_arr, k_col = linear(key.reshape(B * Sk, D).astype(bf),
                              params["wk_t"], params["bk"]), 0
        v_arr, v_col = linear(value.reshape(B * Sk, D).astype(bf),
                              params["wv_t"], params["bv"]), 0

    if is_src:
        # Pass 1 only needs attention column sums for the top-k selection — run the slim
        # column-sum kernel (no V / W_o work, no [B,Sq,Sk] writeback).
        col_sum = _colsum_call(q_arr, q_col, k_arr, k_col, mask3,
                               num_heads=num_heads, B=B, Sq=Sq, Sk=Sk, D=D)
        tgt_k = int(Sk * overlap2)
        # TODO(synk): top_k + scatter are data-dependent; they stay as thin XLA glue.
        _, idx = jax.lax.top_k(col_sum, tgt_k)
        keep = jnp.zeros((B, Sk), jnp.float32).at[
            jnp.arange(B)[:, None], idx].set(1.0)[:, None, :]
    else:
        keep = jnp.ones((B, 1, Sk), jnp.float32)

    out2, attn = _attention_call(q_arr, q_col, k_arr, k_col, v_arr, v_col,
                                 mask3, keep, params["wo_t"], params["bo"],
                                 num_heads=num_heads, B=B, Sq=Sq, Sk=Sk, D=D)
    return out2.reshape(B, Sq, D), attn


# ------------------------------------------------------- pure-JAX reference ---

def ref_mha(params, query, key, value, mask=None, *, num_heads,
            is_src=False, overlap2=0.75):
    """Pure-JAX reference mirroring the kernel's precision choices (bf16 MXU inputs,
    f32 accumulation / softmax).  Note: 1/sqrt(dk) is pre-folded into wq_t/bq."""
    bf = jnp.bfloat16
    B, Sq, D = query.shape
    Sk = key.shape[1]
    dk = D // num_heads

    def proj(x, w_bf, b_f32):
        y = jnp.dot(x.astype(bf), w_bf, preferred_element_type=jnp.float32) + b_f32
        return y.astype(bf)                              # kernel stores projections as bf16

    q2 = proj(query, params["wq_t"], params["bq"])
    k2 = proj(key, params["wk_t"], params["bk"])
    v2 = proj(value, params["wv_t"], params["bv"])
    Q = q2.reshape(B, Sq, num_heads, dk).transpose(0, 2, 1, 3)
    K = k2.reshape(B, Sk, num_heads, dk).transpose(0, 2, 1, 3)
    V = v2.reshape(B, Sk, num_heads, dk).transpose(0, 2, 1, 3)

    scores = jnp.einsum("bhqd,bhkd->bhqk", Q, K, preferred_element_type=jnp.float32)
    if mask is None:
        mask = jnp.ones((B, 1, Sk), jnp.float32)
    m = mask.astype(jnp.float32)
    if m.ndim == 2:
        m = m[:, None, :]
    m4 = jnp.broadcast_to(m[:, None], (B, num_heads, Sq, Sk))
    scores = jnp.where(m4 == 0, -1e9, scores)
    p = jax.nn.softmax(scores, axis=-1)

    if is_src:
        col_sum = jnp.sum(p, axis=(1, 2))                # [B, Sk]
        tgt_k = int(Sk * overlap2)
        _, idx = jax.lax.top_k(col_sum, tgt_k)
        keep = jnp.zeros((B, Sk), jnp.float32).at[jnp.arange(B)[:, None], idx].set(1.0)
        scores = jnp.where(keep[:, None, None, :] == 0, -1e9, scores)
        p = jax.nn.softmax(scores, axis=-1)

    ctx = jnp.einsum("bhqk,bhkd->bhqd", p.astype(bf), V,
                     preferred_element_type=jnp.float32)
    ctx = ctx.transpose(0, 2, 1, 3).reshape(B, Sq, D).astype(bf)
    out = jnp.dot(ctx, params["wo_t"], preferred_element_type=jnp.float32) + params["bo"]
    return out, jnp.sum(p, axis=1)


# --------------------------------------------------------------------- init ---

def init_mha_params(key, d_model, num_heads):
    bf = jnp.bfloat16
    dk = d_model // num_heads
    ks = jax.random.split(key, 8)
    w = lambda k: 0.08 * jax.random.normal(k, (d_model, d_model), jnp.float32)
    b = lambda k: 0.02 * jax.random.normal(k, (d_model,), jnp.float32)
    wq, wk, wv, wo = w(ks[0]), w(ks[1]), w(ks[2]), w(ks[3])
    bq, bk, bv, bo = b(ks[4]), b(ks[5]), b(ks[6]), b(ks[7])
    # Fold the 1/sqrt(dk) score scale into the Q projection (exact, done once in f32),
    # pre-transpose to [in, out], pre-concatenate the fused variants, pre-cast to bf16.
    scale = 1.0 / math.sqrt(dk)
    wq_t = wq.T * scale
    bq_s = bq * scale
    wk_t, wv_t, wo_t = wk.T, wv.T, wo.T
    return dict(
        wq_t=wq_t.astype(bf), wk_t=wk_t.astype(bf), wv_t=wv_t.astype(bf),
        wo_t=wo_t.astype(bf),
        bq=bq_s, bk=bk, bv=bv, bo=bo,
        wqkv_t=jnp.concatenate([wq_t, wk_t, wv_t], axis=1).astype(bf),
        bqkv=jnp.concatenate([bq_s, bk, bv]),
        wkv_t=jnp.concatenate([wk_t, wv_t], axis=1).astype(bf),
        bkv=jnp.concatenate([bk, bv]),
    )


# --------------------------------------------------------------------- main ---

if __name__ == "__main__":
    B, S, d_model, h = 2, 8, 32, 4

    root = jax.random.PRNGKey(0)
    k_x, k_mem, k_p1, k_p2, k_m = jax.random.split(root, 5)
    x = jax.random.normal(k_x, (B, S, d_model), jnp.float32)
    mem = jax.random.normal(k_mem, (B, S, d_model), jnp.float32)
    params_self = init_mha_params(k_p1, d_model, h)
    params_src = init_mha_params(k_p2, d_model, h)

    # Self-attention: random keep/drop mask (diagonal always kept).
    mask_bits = (jax.random.uniform(k_m, (B, S, S)) > 0.3).astype(jnp.float32)
    mask_self = jnp.maximum(mask_bits, jnp.eye(S, dtype=jnp.float32)[None])
    # Source-attention (is_src=True): all keys visible, [B, 1, Sk] mask.
    mask_src = jnp.ones((B, 1, S), jnp.float32)

    out1, attn1 = multi_headed_attention_forward(
        params_self, x, x, x, mask_self, num_heads=h)
    out2, attn2 = multi_headed_attention_forward(
        params_src, x, mem, mem, mask_src, num_heads=h, is_src=True, overlap2=0.75)
    out1, attn1, out2, attn2 = jax.block_until_ready((out1, attn1, out2, attn2))

    ref1, rattn1 = ref_mha(params_self, x, x, x, mask_self, num_heads=h)
    ref2, rattn2 = ref_mha(params_src, x, mem, mem, mask_src, num_heads=h,
                           is_src=True, overlap2=0.75)

    assert out1.shape == (B, S, d_model) and out2.shape == (B, S, d_model)
    assert attn1.shape == (B, S, S) and attn2.shape == (B, S, S)
    assert jnp.max(jnp.abs(out1 - ref1)) < 1e-2, "self-attention output mismatch"
    assert jnp.max(jnp.abs(attn1 - rattn1)) < 2e-2, "self-attention attn mismatch"
    assert jnp.max(jnp.abs(out2 - ref2)) < 1e-2, "src-attention output mismatch"
    assert jnp.max(jnp.abs(attn2 - rattn2)) < 2e-2, "src-attention attn mismatch"

    print("KERNEL_OK")
</pallas_src>

<mosaic_0001>
module attributes {stable_mosaic.version = 11 : i64} {
  func.func @_linear_kernel(%arg0: i32, %arg1: i32, %arg2: i32, %arg3: memref<16x32xbf16, #tpu.memory_space<vmem>>, %arg4: memref<32x96xbf16, #tpu.memory_space<vmem>>, %arg5: memref<1x96xf32, #tpu.memory_space<vmem>>, %arg6: memref<16x96xbf16, #tpu.memory_space<vmem>>, %arg7: memref<16x96xf32, #tpu.memory_space<vmem>>) attributes {dimension_semantics = [#tpu.dimension_semantics<parallel>, #tpu.dimension_semantics<parallel>, #tpu.dimension_semantics<arbitrary>], iteration_bounds = array<i64: 1, 1, 1>, scalar_prefetch = 0 : i64, scratch_operands = 1 : i64, tpu.core_type = #tpu.core_type<tc>, window_params = [{transform_indices = @transform_0, window_bounds = array<i64: 16, 32>}, {transform_indices = @transform_1, window_bounds = array<i64: 32, 96>}, {transform_indices = @transform_2, window_bounds = array<i64: 1, 96>}, {transform_indices = @transform_3, window_bounds = array<i64: 16, 96>}]} {
    %c0_i32 = arith.constant 0 : i32
    %0 = arith.cmpi eq, %arg2, %c0_i32 : i32
    %1 = arith.extui %0 : i1 to i32
    %c0_i32_0 = arith.constant 0 : i32
    %2 = arith.cmpi ne, %1, %c0_i32_0 : i32
    scf.if %2 {
      %cst_10 = arith.constant 0.000000e+00 : f32
      %12 = vector.broadcast %cst_10 : f32 to vector<16x96xf32>
      %c0_11 = arith.constant 0 : index
      %c0_12 = arith.constant 0 : index
      %13 = vector.load %arg7[%c0_11, %c0_12] : memref<16x96xf32, #tpu.memory_space<vmem>>, vector<16x96xf32>
      tpu.vector_store %arg7[%c0_11, %c0_12], %12 {strides = array<i32>} : memref<16x96xf32, #tpu.memory_space<vmem>>, vector<16x96xf32>,
    } else {
    }
    %c0 = arith.constant 0 : index
    %c0_1 = arith.constant 0 : index
    %3 = vector.load %arg7[%c0, %c0_1] : memref<16x96xf32, #tpu.memory_space<vmem>>, vector<16x96xf32>
    %c0_2 = arith.constant 0 : index
    %c0_3 = arith.constant 0 : index
    %4 = vector.load %arg3[%c0_2, %c0_3] : memref<16x32xbf16, #tpu.memory_space<vmem>>, vector<16x32xbf16>
    %c0_4 = arith.constant 0 : index
    %c0_5 = arith.constant 0 : index
    %5 = vector.load %arg4[%c0_4, %c0_5] : memref<32x96xbf16, #tpu.memory_space<vmem>>, vector<32x96xbf16>
    %cst = arith.constant dense<0.000000e+00> : vector<16x96xf32>
    %6 = tpu.matmul %4, %5, %cst {dimension_numbers = #tpu.dot_dimension_numbers<[1], [0], [0], [1], [0, 0, 1, 1], [], []>} : vector<16x32xbf16>, vector<32x96xbf16>, vector<16x96xf32> -> vector<16x96xf32>
    %7 = arith.addf %3, %6 : vector<16x96xf32>
    %c0_6 = arith.constant 0 : index
    %c0_7 = arith.constant 0 : index
    %8 = vector.load %arg7[%c0_6, %c0_7] : memref<16x96xf32, #tpu.memory_space<vmem>>, vector<16x96xf32>
    tpu.vector_store %arg7[%c0_6, %c0_7], %7 {strides = array<i32>} : memref<16x96xf32, #tpu.memory_space<vmem>>, vector<16x96xf32>,
    %c0_i32_8 = arith.constant 0 : i32
    %9 = arith.cmpi eq, %arg2, %c0_i32_8 : i32
    %10 = arith.extui %9 : i1 to i32
    %c0_i32_9 = arith.constant 0 : i32
    %11 = arith.cmpi ne, %10, %c0_i32_9 : i32
    scf.if %11 {
      %c0_10 = arith.constant 0 : index
      %c0_11 = arith.constant 0 : index
      %12 = vector.load %arg7[%c0_10, %c0_11] : memref<16x96xf32, #tpu.memory_space<vmem>>, vector<16x96xf32>
      %c0_12 = arith.constant 0 : index
      %c0_13 = arith.constant 0 : index
      %13 = vector.load %arg5[%c0_12, %c0_13] : memref<1x96xf32, #tpu.memory_space<vmem>>, vector<1x96xf32>
      %14 = vector.broadcast %13 : vector<1x96xf32> to vector<16x96xf32>
      %15 = arith.addf %12, %14 : vector<16x96xf32>
      %16 = arith.truncf %15 : vector<16x96xf32> to vector<16x96xbf16>
      %c0_14 = arith.constant 0 : index
      %c0_15 = arith.constant 0 : index
      %17 = vector.load %arg6[%c0_14, %c0_15] : memref<16x96xbf16, #tpu.memory_space<vmem>>, vector<16x96xbf16>
      tpu.vector_store %arg6[%c0_14, %c0_15], %16 {strides = array<i32>} : memref<16x96xbf16, #tpu.memory_space<vmem>>, vector<16x96xbf16>,
    } else {
    }
    return
  }
  func.func @transform_0(%arg0: i32, %arg1: i32, %arg2: i32) -> (i32, i32) {
    %c0_i32 = arith.constant 0 : i32
    return %arg0, %arg2 : i32, i32
  }
  func.func @transform_1(%arg0: i32, %arg1: i32, %arg2: i32) -> (i32, i32) {
    %c0_i32 = arith.constant 0 : i32
    return %arg2, %arg1 : i32, i32
  }
  func.func @transform_2(%arg0: i32, %arg1: i32, %arg2: i32) -> (i32, i32) {
    %c0_i32 = arith.constant 0 : i32
    %c0_i32_0 = arith.constant 0 : i32
    return %c0_i32, %arg1 : i32, i32
  }
  func.func @transform_3(%arg0: i32, %arg1: i32, %arg2: i32) -> (i32, i32) {
    %c0_i32 = arith.constant 0 : i32
    return %arg0, %arg1 : i32, i32
  }
}

</mosaic_0001>

<llo_original>
// kernel: tpu_custom_call.1
$region0: #{tpu_custom_call.1}
  #allocation0 [shape = 'u32[]', space=smem, size = 0x4, offset = 0x4, fixed_abs, tag = 'smem constant byte address 0x4 - core index']
  #allocation1 [shape = 'u32[72,128]{1,0:T(1,128)}', space=vmem, size = 0x9000, scoped, tag = 'internal scratch']
  #allocation2 [shape = 'f32[16,96]{1,0:T(8,128)}', space=vmem, size = 0x2000, scoped, tag = 'scratch operand']
  %s0 = inlined_call_operand.hbm [shape: bf16[16,32], index: 0, kind: input, shape index: {}]
  %s1 = inlined_call_operand.hbm [shape: bf16[32,96], index: 1, kind: input, shape index: {}]
  %s2 = inlined_call_operand.vmem [shape: f32[1,96], index: 2, kind: input, shape index: {}]
  %s3 = inlined_call_operand.hbm [shape: bf16[16,96], index: 3, kind: output, shape index: {}]
  %s4 = sld [smem:[#allocation0]]
  $region38: #{tpu_custom_call.1} parent=0
    _
  %s6 = ssub.s32 1, %s4
  %s7 = scalar_select 0, %s6, %s4
  $region1: #{tpu_custom_call.1} parent=0
    #allocation3 [shape = 'u8[4096]{0}', space=vmem, size = 0x1000, scoped, tag = 'input window, operand 0, single buffered']
    #allocation4 [shape = 's32[1]{0}', space=sflag, size = 0x4, scoped, tag = 'scoped memory for tpu_custom_call.1']
    #allocation5 [shape = 's32[1]{0}', space=sflag, size = 0x4, scoped, tag = 'scoped memory for tpu_custom_call.1']
    #allocation6 [shape = 'u8[8192]{0}', space=vmem, size = 0x2000, scoped, tag = 'input window, operand 1, single buffered']
    #allocation7 [shape = 's32[1]{0}', space=sflag, size = 0x4, scoped, tag = 'scoped memory for tpu_custom_call.1']
    #allocation8 [shape = 'u8[4096]{0}', space=vmem, size = 0x1000, scoped, tag = 'output window, operand 0, single buffered']
    %8 = vsyncpa [#allocation4], 0
    %9 = vsyncpa [#allocation7], 0
    %10 = vsyncpa [#allocation5], 0
    // Predicated region
    $region2: #{tpu_custom_call.1} parent=1 // pred_check
      _
    $region3: #{tpu_custom_call.1} parent=1 // pred_check_branch
      %12 = sbr.rel (0) target = $region5
    $region4: #{tpu_custom_call.1} parent=1 // pred_region
      %14 = vsyncadd [#allocation4], 0
      %s15 = sshll.u32 %s0, 4
      %s16 = int_to_ptr.hbm [resolvable:$true] %s15
      %s17 = sshll.u32 [#allocation3], 4
      %s18 = int_to_ptr.vmem [resolvable:$true] %s17
      %23 = dma.hbm_to_vmem [thread:$0]  %s16, 128, %s18, [#allocation4], 64, 64, 4
    $region5: #{tpu_custom_call.1} parent=1 // pred_fallthru
      _
    // Predicated region
    $region6: #{tpu_custom_call.1} parent=1 // pred_check
      _
    $region7: #{tpu_custom_call.1} parent=1 // pred_check_branch
      %25 = sbr.rel (0) target = $region9
    $region8: #{tpu_custom_call.1} parent=1 // pred_region
      %27 = vsyncadd [#allocation7], 0
      %s28 = sshll.u32 %s1, 4
      %s29 = int_to_ptr.hbm [resolvable:$true] %s28
      %s30 = sshll.u32 [#allocation6], 4
      %s31 = int_to_ptr.vmem [resolvable:$true] %s30
      %36 = dma.hbm_to_vmem [thread:$0]  %s29, 256, %s31, [#allocation7], 64, 64, 4
    $region9: #{tpu_custom_call.1} parent=1 // pred_fallthru
      _
    // Predicated region
    $region10: #{tpu_custom_call.1} parent=1 // pred_check
      _
    $region11: #{tpu_custom_call.1} parent=1 // pred_check_branch
      %38 = sbr.rel (0) target = $region13
    $region12: #{tpu_custom_call.1} parent=1 // pred_region
      _
    $region13: #{tpu_custom_call.1} parent=1 // pred_fallthru
      _
    // Predicated region
    $region14: #{tpu_custom_call.1} parent=1 // pred_check
      _
    $region15: #{tpu_custom_call.1} parent=1 // pred_check_branch
      %40 = sbr.rel (0) target = $region17
    $region16: #{tpu_custom_call.1} parent=1 // pred_region
      %42 = dma.done [#allocation4], 128
    $region17: #{tpu_custom_call.1} parent=1 // pred_fallthru
      _
    // Predicated region
    $region18: #{tpu_custom_call.1} parent=1 // pred_check
      _
    $region19: #{tpu_custom_call.1} parent=1 // pred_check_branch
      %44 = sbr.rel (0) target = $region21
    $region20: #{tpu_custom_call.1} parent=1 // pred_region
      %46 = dma.done [#allocation7], 256
    $region21: #{tpu_custom_call.1} parent=1 // pred_fallthru
      _
    %p48 = scmp.eq.s32.totalorder 0, 0
    // Predicated region
    $region22: #{tpu_custom_call.1} parent=1 // pred_check
      %p49 = pneg %p48
    $region23: #{tpu_custom_call.1} parent=1 // pred_check_branch
      %51 = sbr.rel (%p49) target = $region25
    $region24: #{tpu_custom_call.1} parent=1 // pred_region
      %vm52 = vcmask 785408
      %53 = vst.msk [vmem:[#allocation2] sm:$0xff] %vm52, 0.0
      %54 = vst.msk [vmem:[#allocation2 + $0x8] sm:$0xff] %vm52, 0.0
    $region25: #{tpu_custom_call.1} parent=1 // pred_fallthru
      _
    %v55 = vld [vmem:[#allocation2] sm:$0xff]
    %v56 = vld [vmem:[#allocation2 + $0x8] sm:$0xff]
    %v57 = vld [vmem:[#allocation3] sm:$0xf]
    %v58 = vld [vmem:[#allocation3 + $0x4] sm:$0xf]
    %v59 = vld [vmem:[#allocation6] sm:$0xf]
    %v60 = vld [vmem:[#allocation6 + $0x4] sm:$0xf]
    %v61 = vld [vmem:[#allocation6 + $0x8] sm:$0xf]
    %v62 = vld [vmem:[#allocation6 + $0xc] sm:$0xf]
    %v65 = vunpack.c.l.b16 %v57
    %v66 = vunpack.c.l.b16 %v58
    %v67 = vpack.c.b16 %v66, %v65
    %v72 = vunpack.c.l.b16 %v59
    %v73 = vunpack.c.l.b16 %v60
    %v74 = vunpack.c.l.b16 %v61
    %v75 = vunpack.c.l.b16 %v62
    %v76 = vpack.c.b16 %v73, %v72
    %v77 = vpack.c.b16 %v75, %v74
    %vm80 = vcmask 261120
    %v82 = vsel %vm80, %v67, 0
    %84 = vmatpush.bf16.msra.mxu0 0
    %85 = vmatpush.bf16.msra.mxu0 0
    %86 = vmatpush.bf16.msra.mxu0 0
    %87 = vmatpush.bf16.msra.mxu0 0
    %88 = vmatpush.bf16.msra.mxu0 0
    %89 = vmatpush.bf16.msra.mxu0 0
    %90 = vmatpush.bf16.msra.mxu0 %v77
    %91 = vmatpush.bf16.msra.mxu0 %v76
    %92 = vmatmul.bf16.gmra.mxu0 %v82
    %v93 = vpop.f32.mrf.mxu0
    %v94 = vadd.f32 0.0, %v93
    %v95 = vpop.f32.mrf.mxu0
    %v96 = vadd.f32 0.0, %v95
    %97 = vdwg.mxu0
    %v98 = vadd.f32 %v55, %v94
    %v99 = vadd.f32 %v56, %v96
    %vm100 = vcmask 785408
    %101 = vst.msk [vmem:[#allocation2] sm:$0xff] %vm100, %v98
    %102 = vst.msk [vmem:[#allocation2 + $0x8] sm:$0xff] %vm100, %v99
    // Predicated region
    $region26: #{tpu_custom_call.1} parent=1 // pred_check
      %p103 = pneg %p48
    $region27: #{tpu_custom_call.1} parent=1 // pred_check_branch
      %105 = sbr.rel (%p103) target = $region29
    $region28: #{tpu_custom_call.1} parent=1 // pred_region
      %v106 = vld [vmem:[#allocation2] sm:$0xff]
      %v107 = vld [vmem:[#allocation2 + $0x8] sm:$0xff]
      %v108 = vld [vmem:[%s2] sm:$0x1]
      %v110 = vperm.slane %v108, 0
      %v112 = vadd.f32 %v106, %v110
      %v113 = vadd.f32 %v107, %v110
      %v114 = vpack.c.bf16 %v112, %v112
      %v115 = vpack.c.bf16 %v113, %v113
      %vm116 = vcmask 781312
      %117 = vst.msk [vmem:[#allocation8] sm:$0xf] %vm116, %v114
      %118 = vst.msk [vmem:[#allocation8 + $0x4] sm:$0xf] %vm116, %v115
    $region29: #{tpu_custom_call.1} parent=1 // pred_fallthru
      _
    // Predicated region
    $region30: #{tpu_custom_call.1} parent=1 // pred_check
      _
    $region31: #{tpu_custom_call.1} parent=1 // pred_check_branch
      %120 = sbr.rel (0) target = $region33
    $region32: #{tpu_custom_call.1} parent=1 // pred_region
      %122 = vsyncadd [#allocation5], 0
      %s123 = sshll.u32 [#allocation8], 4
      %s124 = int_to_ptr.vmem [resolvable:$true] %s123
      %s125 = sshll.u32 %s3, 4
      %s126 = int_to_ptr.hbm [resolvable:$true] %s125
      %131 = dma.vmem_to_hbm [thread:$0]  %s124, 128, %s126, [#allocation5], 64, 64, 4
    $region33: #{tpu_custom_call.1} parent=1 // pred_fallthru
      _
    // Predicated region
    $region34: #{tpu_custom_call.1} parent=1 // pred_check
      _
    $region35: #{tpu_custom_call.1} parent=1 // pred_check_branch
      %133 = sbr.rel (0) target = $region37
    $region36: #{tpu_custom_call.1} parent=1 // pred_region
      %135 = dma.done [#allocation5], 128
    $region37: #{tpu_custom_call.1} parent=1 // pred_fallthru
      _
    %136 = vsyncpa [#allocation4], 1
    %137 = vsyncpa [#allocation7], 1
    %138 = vsyncpa [#allocation5], 1

</llo_original>
